<compile_context>
chip_gen: v7x
topology: tpu7x:2x2x1
jax: 0.10.0
libtpu: 0.0.40
codegen_flags: <defaults>
</compile_context>

<pallas_src>
import math

import jax
import jax.numpy as jnp
from jax import lax
from jax.experimental import pallas as pl
from jax.experimental.pallas import tpu as pltpu


def _round_up(x: int, m: int) -> int:
    return (x + m - 1) // m * m


def _cdiv(a: int, b: int) -> int:
    return (a + b - 1) // b


def _gelu_exact(x):
    # Matches torch.nn.GELU() default (erf variant), computed in f32.
    return 0.5 * x * (1.0 + lax.erf(x * (1.0 / math.sqrt(2.0))))


def _mlp_kernel(x_ref, w1_ref, b1_ref, w2_ref, b2_ref, o_ref, acc_ref):
    # x_ref:  (tm, C_in_p)       token tile (constant across k -> no re-DMA)
    # w1_ref: (C_in_p, th)       fc1 weight slice k (streamed)
    # b1_ref: (n_k, 1, th)       fc1 bias, fully resident; row k selected below
    # w2_ref: (th, C_out_p)      fc2 weight slice k (streamed)
    # b2_ref: (1, C_out_p)       fc2 bias, fully resident
    # o_ref:  (tm, C_out_p)      output tile i, resident across k
    # acc_ref:(tm, C_out_p) f32  accumulator scratch
    k = pl.program_id(1)

    @pl.when(k == 0)
    def _():
        # Fold fc2 bias into the accumulator init (no epilogue add).
        acc_ref[...] = jnp.broadcast_to(
            b2_ref[...].astype(jnp.float32), acc_ref.shape)

    # fc1 partial for hidden slice k: computed exactly once per (i, k).
    h = jnp.dot(x_ref[...], w1_ref[...], preferred_element_type=jnp.float32)
    h = h + b1_ref[k].astype(jnp.float32)          # (1, th) broadcasts over (tm, th)
    h = _gelu_exact(h)                             # exact erf GELU in f32
    # drop1 / drop2: nn.Dropout(p=0.0) -> identity.

    # fc2 partial over the FULL output width; cast h back to the weight dtype so
    # the MXU runs at native (e.g. bf16) rate, accumulate in f32 scratch.
    acc_ref[...] += jnp.dot(h.astype(w2_ref.dtype), w2_ref[...],
                            preferred_element_type=jnp.float32)

    @pl.when(k == pl.num_programs(1) - 1)
    def _():
        o_ref[...] = acc_ref[...].astype(o_ref.dtype)


def mlp_forward(x, w1, b1, w2, b2, *, block_m: int | None = None,
                block_h: int = 512):
    """x: (B, N, C_in), w1: (C_in, H), b1: (1, H) or (H,), w2: (H, C_out),
    b2: (1, C_out) or (C_out,) -> (out: (B, N, C_out), state: {})."""
    B, N, C_in = x.shape
    H = w1.shape[1]
    C_out = w2.shape[1]
    assert w1.shape[0] == C_in and w2.shape[0] == H
    b1 = jnp.asarray(b1).reshape(1, H)
    b2 = jnp.asarray(b2).reshape(1, C_out)
    M = B * N
    out_dtype = x.dtype

    lane = 128
    sub = 8 if jnp.dtype(x.dtype).itemsize >= 4 else 16

    C_in_p = _round_up(C_in, lane)
    C_out_p = _round_up(C_out, lane)
    H_lane = _round_up(H, lane)

    # --- VMEM budget (per-TensorCore): 128 MiB on v5e/v6e, 64 MiB on v7x. ---
    try:
        vmem_cap = int(pltpu.get_tpu_info().vmem_capacity_bytes)
    except Exception:
        vmem_cap = 64 << 20          # conservative fallback (v7x-sized)
    budget = int(vmem_cap * 0.70)

    # --- Initial tile sizes: sublane-aligned token tile, lane-multiple hidden. ---
    m_aligned = _round_up(M, sub)
    if block_m is None:
        block_m = 512 if jnp.dtype(x.dtype).itemsize <= 2 else 256
    tm = min(_round_up(block_m, sub), m_aligned)
    # Keep >= 2 token tiles when possible so both v7x TensorCores get work.
    if m_aligned // tm < 2 and m_aligned >= 2 * sub:
        tm = _round_up(_cdiv(m_aligned, 2), sub)
    th = min(_round_up(block_h, lane), H_lane)

    xs = jnp.dtype(x.dtype).itemsize
    w1s = jnp.dtype(w1.dtype).itemsize
    w2s = jnp.dtype(w2.dtype).itemsize
    os_ = jnp.dtype(out_dtype).itemsize

    def vmem_bytes(tm_, th_):
        est = 0
        est += 2 * tm_ * C_in_p * xs               # x tile, double-buffered
        est += 2 * C_in_p * th_ * w1s              # w1 tile, double-buffered
        est += 2 * th_ * C_out_p * w2s             # w2 tile, double-buffered
        est += 2 * tm_ * C_out_p * os_             # output tile, double-buffered
        est += tm_ * C_out_p * 4                   # f32 accumulator scratch
        est += tm_ * th_ * (4 + w2s)               # f32 h temp + cast copy
        est += _cdiv(H_lane, th_) * 8 * th_ * w1s  # resident b1 (8-sublane padded)
        est += 8 * C_out_p * w2s                   # resident b2
        return est

    # Shrink hidden tile first (never the lane-dense output width), then tm.
    while vmem_bytes(tm, th) > budget and (th > lane or tm > sub):
        if th > lane:
            th = max(lane, th // 2)
        else:
            tm = max(sub, _round_up(tm // 2, sub))
    # TODO(synk): for very large C_out the full-width accumulator may still not
    # fit at tm == sub; a (i, j, k) grid with a VMEM h-cache would be needed then.

    M_p = _round_up(M, tm)
    H_p = _round_up(H, th)
    n_k = H_p // th

    # Zero-padding is semantics-preserving: padded C_in columns contribute 0 to
    # fc1, padded hidden units give gelu(0)=0 and hit zero rows of w2, padded
    # C_out columns are sliced off below.
    x2d = x.reshape(M, C_in)
    if (M_p, C_in_p) != (M, C_in):
        x2d = jnp.pad(x2d, ((0, M_p - M), (0, C_in_p - C_in)))
    w1_p = w1 if (C_in_p, H_p) == (C_in, H) else \
        jnp.pad(w1, ((0, C_in_p - C_in), (0, H_p - H)))
    b1_p = b1 if H_p == H else jnp.pad(b1, ((0, 0), (0, H_p - H)))
    w2_p = w2 if (H_p, C_out_p) == (H, C_out) else \
        jnp.pad(w2, ((0, H_p - H), (0, C_out_p - C_out)))
    b2_p = b2 if C_out_p == C_out else jnp.pad(b2, ((0, 0), (0, C_out_p - C_out)))
    b1_tiles = b1_p.reshape(n_k, 1, th)

    n_i = M_p // tm
    grid = (n_i, n_k)

    # CostEstimate now matches executed work (no fc1/GELU recomputation).
    cost = pl.CostEstimate(
        flops=int(2 * M_p * (C_in_p * H_p + H_p * C_out_p)),
        transcendentals=int(M_p * H_p),
        bytes_accessed=int(x2d.size * xs
                           + n_i * (w1_p.size * w1s + w2_p.size * w2s)
                           + b1_tiles.size * w1s + b2_p.size * w2s
                           + M_p * C_out_p * os_),
    )

    vmem_limit = min(int(vmem_cap * 0.85),
                     max(32 << 20, vmem_bytes(tm, th) + (16 << 20)))

    out2d = pl.pallas_call(
        _mlp_kernel,
        out_shape=jax.ShapeDtypeStruct((M_p, C_out_p), out_dtype),
        grid_spec=pltpu.PrefetchScalarGridSpec(
            num_scalar_prefetch=0,
            grid=grid,
            in_specs=[
                pl.BlockSpec((tm, C_in_p), lambda i, k: (i, 0)),      # x tile
                pl.BlockSpec((C_in_p, th), lambda i, k: (0, k)),      # w1 slice
                pl.BlockSpec((n_k, 1, th), lambda i, k: (0, 0, 0)),   # b1 resident
                pl.BlockSpec((th, C_out_p), lambda i, k: (k, 0)),     # w2 slice
                pl.BlockSpec((1, C_out_p), lambda i, k: (0, 0)),      # b2 resident
            ],
            out_specs=pl.BlockSpec((tm, C_out_p), lambda i, k: (i, 0)),
            scratch_shapes=[pltpu.VMEM((tm, C_out_p), jnp.float32)],
        ),
        compiler_params=pltpu.CompilerParams(
            dimension_semantics=("parallel", "arbitrary"),
            vmem_limit_bytes=vmem_limit,
        ),
        cost_estimate=cost,
    )(x2d, w1_p, b1_tiles, w2_p, b2_p)

    out2d = out2d[:M, :C_out]
    return out2d.reshape(B, N, C_out), {}


def init_mlp_params(key, in_features, hidden_features=None, out_features=None,
                    dtype=jnp.float32):
    """Deterministic init mimicking nn.Linear defaults (kaiming-uniform-ish)."""
    hidden_features = hidden_features or in_features
    out_features = out_features or in_features
    k1, k2, k3, k4 = jax.random.split(key, 4)

    bound1 = 1.0 / math.sqrt(in_features)
    w1 = jax.random.uniform(k1, (in_features, hidden_features),
                            minval=-bound1, maxval=bound1, dtype=dtype)
    b1 = jax.random.uniform(k2, (1, hidden_features),
                            minval=-bound1, maxval=bound1, dtype=dtype)

    bound2 = 1.0 / math.sqrt(hidden_features)
    w2 = jax.random.uniform(k3, (hidden_features, out_features),
                            minval=-bound2, maxval=bound2, dtype=dtype)
    b2 = jax.random.uniform(k4, (1, out_features),
                            minval=-bound2, maxval=bound2, dtype=dtype)
    return w1, b1, w2, b2


if __name__ == "__main__":
    key = jax.random.PRNGKey(0)
    kx, kp = jax.random.split(key)

    # Small shapes consistent with the module: (batch, seq, in_features)
    B, N, C_in, H = 2, 8, 32, 64
    x = jax.random.normal(kx, (B, N, C_in), dtype=jnp.float32)
    w1, b1, w2, b2 = init_mlp_params(kp, C_in, hidden_features=H,
                                     out_features=C_in)

    out, state = mlp_forward(x, w1, b1, w2, b2)
    out = jax.block_until_ready(out)

    # Pure-JAX reference (same semantics as the PyTorch forward in eval mode).
    h_ref = jnp.dot(x.reshape(-1, C_in), w1) + b1
    h_ref = 0.5 * h_ref * (1.0 + lax.erf(h_ref / math.sqrt(2.0)))
    y_ref = (jnp.dot(h_ref, w2) + b2).reshape(B, N, C_in)
    assert jnp.allclose(out, y_ref, atol=1e-5, rtol=1e-5), "mismatch vs reference (f32)"
    assert state == {}

    # Exercise the mixed-precision (bf16 operands, f32 accumulation) path.
    out_bf16, _ = mlp_forward(x.astype(jnp.bfloat16),
                              w1.astype(jnp.bfloat16), b1.astype(jnp.bfloat16),
                              w2.astype(jnp.bfloat16), b2.astype(jnp.bfloat16))
    out_bf16 = jax.block_until_ready(out_bf16)
    assert bool(jnp.all(jnp.isfinite(out_bf16.astype(jnp.float32))))
    assert jnp.allclose(out_bf16.astype(jnp.float32), y_ref, atol=0.15, rtol=0.15), \
        "mismatch vs reference (bf16)"

    print("KERNEL_OK")
</pallas_src>

<mosaic_0001>
module attributes {stable_mosaic.version = 11 : i64} {
  func.func @_mlp_kernel(%arg0: i32, %arg1: i32, %arg2: memref<8x128xf32, #tpu.memory_space<vmem>>, %arg3: memref<128x128xf32, #tpu.memory_space<vmem>>, %arg4: memref<1x1x128xf32, #tpu.memory_space<vmem>>, %arg5: memref<128x128xf32, #tpu.memory_space<vmem>>, %arg6: memref<1x128xf32, #tpu.memory_space<vmem>>, %arg7: memref<8x128xf32, #tpu.memory_space<vmem>>, %arg8: memref<8x128xf32, #tpu.memory_space<vmem>>) attributes {dimension_semantics = [#tpu.dimension_semantics<parallel>, #tpu.dimension_semantics<arbitrary>], iteration_bounds = array<i64: 2, 1>, scalar_prefetch = 0 : i64, scratch_operands = 1 : i64, tpu.core_type = #tpu.core_type<tc>, window_params = [{transform_indices = @transform_0, window_bounds = array<i64: 8, 128>}, {transform_indices = @transform_1, window_bounds = array<i64: 128, 128>}, {pipeline_mode = #tpu.pipeline_mode<synchronous>, transform_indices = @transform_2, window_bounds = array<i64: 1, 1, 128>}, {transform_indices = @transform_3, window_bounds = array<i64: 128, 128>}, {pipeline_mode = #tpu.pipeline_mode<synchronous>, transform_indices = @transform_4, window_bounds = array<i64: 1, 128>}, {transform_indices = @transform_5, window_bounds = array<i64: 8, 128>}]} {
    %c0_i32 = arith.constant 0 : i32
    %0 = arith.cmpi eq, %arg1, %c0_i32 : i32
    %1 = arith.extui %0 : i1 to i32
    %c0_i32_0 = arith.constant 0 : i32
    %2 = arith.cmpi ne, %1, %c0_i32_0 : i32
    scf.if %2 {
      %c0_18 = arith.constant 0 : index
      %c0_19 = arith.constant 0 : index
      %27 = vector.load %arg6[%c0_18, %c0_19] : memref<1x128xf32, #tpu.memory_space<vmem>>, vector<1x128xf32>
      %28 = vector.shape_cast %27 : vector<1x128xf32> to vector<1x128xf32>
      %29 = vector.broadcast %28 : vector<1x128xf32> to vector<8x128xf32>
      %c0_20 = arith.constant 0 : index
      %c0_21 = arith.constant 0 : index
      %30 = vector.load %arg8[%c0_20, %c0_21] : memref<8x128xf32, #tpu.memory_space<vmem>>, vector<8x128xf32>
      tpu.vector_store %arg8[%c0_20, %c0_21], %29 {strides = array<i32>} : memref<8x128xf32, #tpu.memory_space<vmem>>, vector<8x128xf32>,
    } else {
    }
    %c0 = arith.constant 0 : index
    %c0_1 = arith.constant 0 : index
    %3 = vector.load %arg2[%c0, %c0_1] : memref<8x128xf32, #tpu.memory_space<vmem>>, vector<8x128xf32>
    %c0_2 = arith.constant 0 : index
    %c0_3 = arith.constant 0 : index
    %4 = vector.load %arg3[%c0_2, %c0_3] : memref<128x128xf32, #tpu.memory_space<vmem>>, vector<128x128xf32>
    %cst = arith.constant dense<0.000000e+00> : vector<8x128xf32>
    %5 = tpu.matmul %3, %4, %cst {dimension_numbers = #tpu.dot_dimension_numbers<[1], [0], [0], [1], [0, 0, 1, 1], [], []>} : vector<8x128xf32>, vector<128x128xf32>, vector<8x128xf32> -> vector<8x128xf32>
    %6 = arith.index_cast %arg1 : i32 to index
    %c0_4 = arith.constant 0 : index
    %c0_5 = arith.constant 0 : index
    %7 = vector.load %arg4[%6, %c0_4, %c0_5] : memref<1x1x128xf32, #tpu.memory_space<vmem>>, vector<1x1x128xf32>
    %8 = vector.shape_cast %7 : vector<1x1x128xf32> to vector<1x128xf32>
    %9 = vector.broadcast %8 : vector<1x128xf32> to vector<8x128xf32>
    %10 = arith.addf %5, %9 : vector<8x128xf32>
    %cst_6 = arith.constant 5.000000e-01 : f32
    %11 = vector.broadcast %cst_6 : f32 to vector<8x128xf32>
    %12 = arith.mulf %11, %10 : vector<8x128xf32>
    %cst_7 = arith.constant 0.707106769 : f32
    %13 = vector.broadcast %cst_7 : f32 to vector<8x128xf32>
    %14 = arith.mulf %10, %13 : vector<8x128xf32>
    %15 = math.erf %14 : vector<8x128xf32>
    %cst_8 = arith.constant 1.000000e+00 : f32
    %16 = vector.broadcast %cst_8 : f32 to vector<8x128xf32>
    %17 = arith.addf %16, %15 : vector<8x128xf32>
    %18 = arith.mulf %12, %17 : vector<8x128xf32>
    %c0_9 = arith.constant 0 : index
    %c0_10 = arith.constant 0 : index
    %19 = vector.load %arg8[%c0_9, %c0_10] : memref<8x128xf32, #tpu.memory_space<vmem>>, vector<8x128xf32>
    %c0_11 = arith.constant 0 : index
    %c0_12 = arith.constant 0 : index
    %20 = vector.load %arg5[%c0_11, %c0_12] : memref<128x128xf32, #tpu.memory_space<vmem>>, vector<128x128xf32>
    %cst_13 = arith.constant dense<0.000000e+00> : vector<8x128xf32>
    %21 = tpu.matmul %18, %20, %cst_13 {dimension_numbers = #tpu.dot_dimension_numbers<[1], [0], [0], [1], [0, 0, 1, 1], [], []>} : vector<8x128xf32>, vector<128x128xf32>, vector<8x128xf32> -> vector<8x128xf32>
    %22 = arith.addf %19, %21 : vector<8x128xf32>
    %c0_14 = arith.constant 0 : index
    %c0_15 = arith.constant 0 : index
    %23 = vector.load %arg8[%c0_14, %c0_15] : memref<8x128xf32, #tpu.memory_space<vmem>>, vector<8x128xf32>
    tpu.vector_store %arg8[%c0_14, %c0_15], %22 {strides = array<i32>} : memref<8x128xf32, #tpu.memory_space<vmem>>, vector<8x128xf32>,
    %c0_i32_16 = arith.constant 0 : i32
    %24 = arith.cmpi eq, %arg1, %c0_i32_16 : i32
    %25 = arith.extui %24 : i1 to i32
    %c0_i32_17 = arith.constant 0 : i32
    %26 = arith.cmpi ne, %25, %c0_i32_17 : i32
    scf.if %26 {
      %c0_18 = arith.constant 0 : index
      %c0_19 = arith.constant 0 : index
      %27 = vector.load %arg8[%c0_18, %c0_19] : memref<8x128xf32, #tpu.memory_space<vmem>>, vector<8x128xf32>
      %c0_20 = arith.constant 0 : index
      %c0_21 = arith.constant 0 : index
      %28 = vector.load %arg7[%c0_20, %c0_21] : memref<8x128xf32, #tpu.memory_space<vmem>>, vector<8x128xf32>
      tpu.vector_store %arg7[%c0_20, %c0_21], %27 {strides = array<i32>} : memref<8x128xf32, #tpu.memory_space<vmem>>, vector<8x128xf32>,
    } else {
    }
    return
  }
  func.func @transform_0(%arg0: i32, %arg1: i32) -> (i32, i32) {
    %c0_i32 = arith.constant 0 : i32
    %c0_i32_0 = arith.constant 0 : i32
    return %arg0, %c0_i32 : i32, i32
  }
  func.func @transform_1(%arg0: i32, %arg1: i32) -> (i32, i32) {
    %c0_i32 = arith.constant 0 : i32
    %c0_i32_0 = arith.constant 0 : i32
    return %c0_i32, %arg1 : i32, i32
  }
  func.func @transform_2(%arg0: i32, %arg1: i32) -> (i32, i32, i32) {
    %c0_i32 = arith.constant 0 : i32
    %c0_i32_0 = arith.constant 0 : i32
    %c0_i32_1 = arith.constant 0 : i32
    %c0_i32_2 = arith.constant 0 : i32
    return %c0_i32, %c0_i32_0, %c0_i32_1 : i32, i32, i32
  }
  func.func @transform_3(%arg0: i32, %arg1: i32) -> (i32, i32) {
    %c0_i32 = arith.constant 0 : i32
    %c0_i32_0 = arith.constant 0 : i32
    return %arg1, %c0_i32 : i32, i32
  }
  func.func @transform_4(%arg0: i32, %arg1: i32) -> (i32, i32) {
    %c0_i32 = arith.constant 0 : i32
    %c0_i32_0 = arith.constant 0 : i32
    %c0_i32_1 = arith.constant 0 : i32
    return %c0_i32, %c0_i32_0 : i32, i32
  }
  func.func @transform_5(%arg0: i32, %arg1: i32) -> (i32, i32) {
    %c0_i32 = arith.constant 0 : i32
    %c0_i32_0 = arith.constant 0 : i32
    return %arg0, %c0_i32 : i32, i32
  }
}

</mosaic_0001>

<llo_original>
// kernel: tpu_custom_call.1
$region0: #{tpu_custom_call.1}
  #allocation0 [shape = 'u32[]', space=smem, size = 0x4, offset = 0x4, fixed_abs, tag = 'smem constant byte address 0x4 - core index']
  #allocation1 [shape = 'u32[144,128]{1,0:T(1,128)}', space=vmem, size = 0x12000, scoped, tag = 'internal scratch']
  #allocation2 [shape = 'f32[8,128]{1,0:T(8,128)}', space=vmem, size = 0x1000, scoped, tag = 'scratch operand']
  %s0 = inlined_call_operand.hbm [shape: f32[16,128], index: 0, kind: input, shape index: {}]
  %s1 = inlined_call_operand.hbm [shape: f32[128,128], index: 1, kind: input, shape index: {}]
  %s2 = inlined_call_operand.vmem [shape: f32[1,1,128], index: 2, kind: input, shape index: {}]
  %s3 = inlined_call_operand.hbm [shape: f32[128,128], index: 3, kind: input, shape index: {}]
  %s4 = inlined_call_operand.vmem [shape: f32[1,128], index: 4, kind: input, shape index: {}]
  %s5 = inlined_call_operand.hbm [shape: f32[16,128], index: 5, kind: output, shape index: {}]
  %s6 = sld [smem:[#allocation0]]
  $region73: #{tpu_custom_call.1} parent=0
    _
  %s8 = ssub.s32 1, %s6
  %s9 = scalar_select 0, %s8, %s6
  $region1: #{tpu_custom_call.1} parent=0
    #allocation3 [shape = 'u8[8192]{0}', space=vmem, size = 0x2000, scoped, tag = 'input window, operand 0']
    #allocation4 [shape = 's32[2]{0}', space=sflag, size = 0x8, scoped, tag = 'scoped memory for tpu_custom_call.1']
    #allocation5 [shape = 's32[2]{0}', space=sflag, size = 0x8, scoped, tag = 'scoped memory for tpu_custom_call.1']
    #allocation6 [shape = 'u8[65536]{0}', space=vmem, size = 0x10000, scoped, tag = 'input window, operand 1, single buffered']
    #allocation7 [shape = 's32[1]{0}', space=sflag, size = 0x4, scoped, tag = 'scoped memory for tpu_custom_call.1']
    #allocation8 [shape = 'u8[65536]{0}', space=vmem, size = 0x10000, scoped, tag = 'input window, operand 3, single buffered']
    #allocation9 [shape = 'u8[8192]{0}', space=vmem, size = 0x2000, scoped, tag = 'output window, operand 0']
    %10 = vsyncpa [#allocation4], 0
    %s11 = scalar_lea.sflag [#allocation4], 1
    %12 = vsyncpa %s11, 0
    %13 = vsyncpa [#allocation7], 0
    %14 = vsyncpa [#allocation5], 0
    %s15 = scalar_lea.sflag [#allocation5], 1
    %16 = vsyncpa %s15, 0
    loop: start=0, step=1, limit=4
    $region2: #{tpu_custom_call.1} parent=1 // loop_pre_header
      _
    $region3: #{tpu_custom_call.1} parent=1 // loop_header
      %s18 = sphi 0, %s22
      %p19 = scmp.ge.s32.totalorder %s18, 4
      %s25 = sphi 0, %s37
      %s26 = sphi 0, %s33
      %s27 = sphi 0, %s25
      %s28 = sphi 0, %s26
      %s29 = sphi 0, %s27
      %s30 = sphi 0, %s28
      %s40 = sphi 0, %s42
      %s43 = sphi 0, %s40
      %s44 = sphi 0, %s43
      %s60 = sphi 0, %s44
      %s66 = sphi 0, %s68
      %s69 = sphi 0, %s66
      %s70 = sphi 0, %s69
      %s86 = sphi 0, %s70
      %s90 = sphi 0, %s90
      %s92 = sphi 0, %s90
      %s93 = sphi 0, %s92
      %s107 = sphi 0, %s93
      %s113 = sphi 0, %s115
      %s116 = sphi 0, %s113
      %s117 = sphi 0, %s116
      %s133 = sphi 0, %s117
      %s137 = sphi 0, %s137
      %s139 = sphi 0, %s137
      %s140 = sphi 0, %s139
      %s154 = sphi 0, %s140
      %s160 = sphi 0, %s162
      %s163 = sphi 0, %s160
      %s164 = sphi 0, %s163
      %s180 = sphi 0, %s164
    $region4: #{tpu_custom_call.1} parent=1 // loop_header_branch
      %21 = sbr.rel (%p19) target = $region8
    $region5: #{tpu_custom_call.1} parent=1 // loop_body
      %s23 = ssub.s32 %s18, 1
      %s24 = ssub.s32 %s18, 2
      %s31 = sadd.s32 1, %s26
      %p32 = scmp.ge.s32.totalorder %s31, 1
      %s33 = scalar_select %p32, 0, %s31
      %s34 = sadd.s32 1, %s25
      %s35 = scalar_select %p32, %s34, %s25
      %p36 = scmp.ge.s32.totalorder %s35, 2
      %s37 = scalar_select %p36, 0, %s35
      %s38 = ssub.s32 %s25, %s37
      %p39 = scmp.eq.s32.totalorder %s38, 0
      %s41 = sadd.s32 %s40, 1
      %s42 = scalar_select %p39, %s40, %s41
      %p45 = pneg %p39
      %p46 = scmp.eq.s32.totalorder %s18, 1
      %p47 = por %p45, %p46
      %p48 = scmp.ne.s32.totalorder %s40, %s43
      %p49 = scmp.eq.s32.totalorder %s18, 0
      %p50 = por %p48, %p49
      %p51 = scmp.ne.s32.totalorder %s40, %s43
      %p52 = scmp.eq.s32.totalorder %s23, 1
      %p53 = por %p51, %p52
      %p54 = scmp.ne.s32.totalorder %s43, %s44
      %p55 = scmp.eq.s32.totalorder %s23, 0
      %p56 = por %p54, %p55
      %p57 = scmp.ne.s32.totalorder %s43, %s44
      %p58 = scmp.eq.s32.totalorder %s24, 1
      %p59 = por %p57, %p58
      %p61 = scmp.ne.s32.totalorder %s44, %s60
      %p62 = scmp.eq.s32.totalorder %s24, 0
      %p63 = por %p61, %p62
      %s64 = ssub.s32 %s26, %s33
      %p65 = scmp.eq.s32.totalorder %s64, 0
      %s67 = sadd.s32 %s66, 1
      %s68 = scalar_select %p65, %s66, %s67
      %p71 = pneg %p65
      %p72 = scmp.eq.s32.totalorder %s18, 1
      %p73 = por %p71, %p72
      %p74 = scmp.ne.s32.totalorder %s66, %s69
      %p75 = scmp.eq.s32.totalorder %s18, 0
      %p76 = por %p74, %p75
      %p77 = scmp.ne.s32.totalorder %s66, %s69
      %p78 = scmp.eq.s32.totalorder %s23, 1
      %p79 = por %p77, %p78
      %p80 = scmp.ne.s32.totalorder %s69, %s70
      %p81 = scmp.eq.s32.totalorder %s23, 0
      %p82 = por %p80, %p81
      %p83 = scmp.ne.s32.totalorder %s69, %s70
      %p84 = scmp.eq.s32.totalorder %s24, 1
      %p85 = por %p83, %p84
      %p87 = scmp.ne.s32.totalorder %s70, %s86
      %p88 = scmp.eq.s32.totalorder %s24, 0
      %p89 = por %p87, %p88
      %s91 = sadd.s32 %s90, 1
      %p94 = scmp.eq.s32.totalorder %s18, 1
      %p95 = scmp.ne.s32.totalorder %s90, %s92
      %p96 = scmp.eq.s32.totalorder %s18, 0
      %p97 = por %p95, %p96
      %p98 = scmp.ne.s32.totalorder %s90, %s92
      %p99 = scmp.eq.s32.totalorder %s23, 1
      %p100 = por %p98, %p99
      %p101 = scmp.ne.s32.totalorder %s92, %s93
      %p102 = scmp.eq.s32.totalorder %s23, 0
      %p103 = por %p101, %p102
      %p104 = scmp.ne.s32.totalorder %s92, %s93
      %p105 = scmp.eq.s32.totalorder %s24, 1
      %p106 = por %p104, %p105
      %p108 = scmp.ne.s32.totalorder %s93, %s107
      %p109 = scmp.eq.s32.totalorder %s24, 0
      %p110 = por %p108, %p109
      %s111 = ssub.s32 %s26, %s33
      %p112 = scmp.eq.s32.totalorder %s111, 0
      %s114 = sadd.s32 %s113, 1
      %s115 = scalar_select %p112, %s113, %s114
      %p118 = pneg %p112
      %p119 = scmp.eq.s32.totalorder %s18, 1
      %p120 = por %p118, %p119
      %p121 = scmp.ne.s32.totalorder %s113, %s116
      %p122 = scmp.eq.s32.totalorder %s18, 0
      %p123 = por %p121, %p122
      %p124 = scmp.ne.s32.totalorder %s113, %s116
      %p125 = scmp.eq.s32.totalorder %s23, 1
      %p126 = por %p124, %p125
      %p127 = scmp.ne.s32.totalorder %s116, %s117
      %p128 = scmp.eq.s32.totalorder %s23, 0
      %p129 = por %p127, %p128
      %p130 = scmp.ne.s32.totalorder %s116, %s117
      %p131 = scmp.eq.s32.totalorder %s24, 1
      %p132 = por %p130, %p131
      %p134 = scmp.ne.s32.totalorder %s117, %s133
      %p135 = scmp.eq.s32.totalorder %s24, 0
      %p136 = por %p134, %p135
      %s138 = sadd.s32 %s137, 1
      %p141 = scmp.eq.s32.totalorder %s18, 1
      %p142 = scmp.ne.s32.totalorder %s137, %s139
      %p143 = scmp.eq.s32.totalorder %s18, 0
      %p144 = por %p142, %p143
      %p145 = scmp.ne.s32.totalorder %s137, %s139
      %p146 = scmp.eq.s32.totalorder %s23, 1
      %p147 = por %p145, %p146
      %p148 = scmp.ne.s32.totalorder %s139, %s140
      %p149 = scmp.eq.s32.totalorder %s23, 0
      %p150 = por %p148, %p149
      %p151 = scmp.ne.s32.totalorder %s139, %s140
      %p152 = scmp.eq.s32.totalorder %s24, 1
      %p153 = por %p151, %p152
      %p155 = scmp.ne.s32.totalorder %s140, %s154
      %p156 = scmp.eq.s32.totalorder %s24, 0
      %p157 = por %p155, %p156
      %s158 = ssub.s32 %s25, %s37
      %p159 = scmp.eq.s32.totalorder %s158, 0
      %s161 = sadd.s32 %s160, 1
      %s162 = scalar_select %p159, %s160, %s161
      %p165 = pneg %p159
      %p166 = scmp.eq.s32.totalorder %s18, 1
      %p167 = por %p165, %p166
      %p168 = scmp.ne.s32.totalorder %s160, %s163
      %p169 = scmp.eq.s32.totalorder %s18, 0
      %p170 = por %p168, %p169
      %p171 = scmp.ne.s32.totalorder %s160, %s163
      %p172 = scmp.eq.s32.totalorder %s23, 1
      %p173 = por %p171, %p172
      %p174 = scmp.ne.s32.totalorder %s163, %s164
      %p175 = scmp.eq.s32.totalorder %s23, 0
      %p176 = por %p174, %p175
      %p177 = scmp.ne.s32.totalorder %s163, %s164
      %p178 = scmp.eq.s32.totalorder %s24, 1
      %p179 = por %p177, %p178
      %p181 = scmp.ne.s32.totalorder %s164, %s180
      %p182 = scmp.eq.s32.totalorder %s24, 0
      %p183 = por %p181, %p182
      %p184 = scmp.le.s32.totalorder 1, %s18
      %p185 = scmp.lt.s32.totalorder %s18, 3
      %p186 = pnand %p184, %p185
      %p187 = pneg %p186
      // Predicated region
      $region9: #{tpu_custom_call.1} parent=5 // pred_check
        _
      $region10: #{tpu_custom_call.1} parent=5 // pred_check_branch
        %189 = sbr.rel (%p186) target = $region12
      $region11: #{tpu_custom_call.1} parent=5 // pred_region
        %s190 = ssub.s32 %s18, 1
        // Predicated region
        $region13: #{tpu_custom_call.1} parent=11 // pred_check
          %p191 = pneg %p82
        $region14: #{tpu_custom_call.1} parent=11 // pred_check_branch
          %193 = sbr.rel (%p191) target = $region16
        $region15: #{tpu_custom_call.1} parent=11 // pred_region
          %s195 = ssub.s32 2048, 2048
          %196 = vsyncadd [#allocation7], %s195
          %s197 = smul.addr %s28, 128
          %s198 = scalar_lea.hbm %s1, %s197
          %s199 = sshll.u32 [#allocation6], 4
          %s200 = int_to_ptr.vmem [resolvable:$true] %s199
          %205 = dma.hbm_to_vmem [thread:$0]  %s198, 2048, %s200, [#allocation7], 128, 128, 8
        $region16: #{tpu_custom_call.1} parent=11 // pred_fallthru
          _
        // Predicated region
        $region17: #{tpu_custom_call.1} parent=11 // pred_check
          %p206 = pneg %p103
        $region18: #{tpu_custom_call.1} parent=11 // pred_check_branch
          %208 = sbr.rel (%p206) target = $region20
        $region19: #{tpu_custom_call.1} parent=11 // pred_region
          _
        $region20: #{tpu_custom_call.1} parent=11 // pred_fallthru
          _
        // Predicated region
        $region21: #{tpu_custom_call.1} parent=11 // pred_check
          %p209 = pneg %p129
        $region22: #{tpu_custom_call.1} parent=11 // pred_check_branch
          %211 = sbr.rel (%p209) target = $region24
        $region23: #{tpu_custom_call.1} parent=11 // pred_region
          %s212 = smul.u32 16, %s28
          %s214 = ssub.s32 2048, 2048
          %215 = vsyncadd [#allocation7], %s214
          %s216 = smul.addr %s212, 128
          %s217 = scalar_lea.hbm %s3, %s216
          %s218 = sshll.u32 [#allocation8], 4
          %s219 = int_to_ptr.vmem [resolvable:$true] %s218
          %224 = dma.hbm_to_vmem [thread:$0]  %s217, 2048, %s219, [#allocation7], 128, 128, 8
        $region24: #{tpu_custom_call.1} parent=11 // pred_fallthru
          _
        // Predicated region
        $region25: #{tpu_custom_call.1} parent=11 // pred_check
          %p225 = pneg %p150
        $region26: #{tpu_custom_call.1} parent=11 // pred_check_branch
          %227 = sbr.rel (%p225) target = $region28
        $region27: #{tpu_custom_call.1} parent=11 // pred_region
          _
        $region28: #{tpu_custom_call.1} parent=11 // pred_fallthru
          _
      $region12: #{tpu_custom_call.1} parent=5 // pred_fallthru
        _
      %p228 = scmp.lt.s32.totalorder %s18, 2
      // Predicated region
      $region29: #{tpu_custom_call.1} parent=5 // pred_check
        %p229 = pneg %p228
      $region30: #{tpu_custom_call.1} parent=5 // pred_check_branch
        %231 = sbr.rel (%p229) target = $region32
      $region31: #{tpu_custom_call.1} parent=5 // pred_region
        // Predicated region
        $region33: #{tpu_custom_call.1} parent=31 // pred_check
          %p232 = pneg %p50
        $region34: #{tpu_custom_call.1} parent=31 // pred_check_branch
          %234 = sbr.rel (%p232) target = $region36
        $region35: #{tpu_custom_call.1} parent=31 // pred_region
          %s235 = sand.u32 %s40, 1
          %s236 = scalar_lea.sflag [#allocation4], %s235
          %s237 = sand.u32 %s40, 1
          %s238 = smul.addr %s237, 8
          %s239 = scalar_lea.vmem [#allocation3], %s238
          %s241 = ssub.s32 128, 128
          %242 = vsyncadd %s236, %s241
          %s243 = smul.addr %s25, 128
          %s244 = scalar_lea.hbm %s0, %s243
          %s246 = sshll.u32 %s239, 4
          %s247 = int_to_ptr.vmem [resolvable:$true] %s246
          %249 = dma.hbm_to_vmem [thread:$0]  %s244, 128, %s247, %s236
        $region36: #{tpu_custom_call.1} parent=31 // pred_fallthru
          _
      $region32: #{tpu_custom_call.1} parent=5 // pred_fallthru
        _
      %p250 = scmp.le.s32.totalorder 1, %s18
      %p251 = scmp.lt.s32.totalorder %s18, 3
      %p252 = pnand %p250, %p251
      %p253 = pneg %p252
      // Predicated region
      $region37: #{tpu_custom_call.1} parent=5 // pred_check
        _
      $region38: #{tpu_custom_call.1} parent=5 // pred_check_branch
        %255 = sbr.rel (%p252) target = $region40
      $region39: #{tpu_custom_call.1} parent=5 // pred_region
        %s256 = ssub.s32 %s18, 1
        %s257 = sand.u32 %s43, 1
        %s258 = scalar_lea.sflag [#allocation4], %s257
        %s259 = sand.u32 %s43, 1
        %s260 = smul.addr %s259, 8
        %s261 = scalar_lea.vmem [#allocation3], %s260
        // Predicated region
        $region41: #{tpu_custom_call.1} parent=39 // pred_check
          %p262 = pneg %p56
        $region42: #{tpu_custom_call.1} parent=39 // pred_check_branch
          %264 = sbr.rel (%p262) target = $region44
        $region43: #{tpu_custom_call.1} parent=39 // pred_region
          %265 = dma.done %s258, 128
        $region44: #{tpu_custom_call.1} parent=39 // pred_fallthru
          _
        // Predicated region
        $region45: #{tpu_custom_call.1} parent=39 // pred_check
          %p266 = pneg %p82
        $region46: #{tpu_custom_call.1} parent=39 // pred_check_branch
          %268 = sbr.rel (%p266) target = $region48
        $region47: #{tpu_custom_call.1} parent=39 // pred_region
          %269 = dma.done [#allocation7], 2048
        $region48: #{tpu_custom_call.1} parent=39 // pred_fallthru
          _
        // Predicated region
        $region49: #{tpu_custom_call.1} parent=39 // pred_check
          %p270 = pneg %p129
        $region50: #{tpu_custom_call.1} parent=39 // pred_check_branch
          %272 = sbr.rel (%p270) target = $region52
        $region51: #{tpu_custom_call.1} parent=39 // pred_region
          %273 = dma.done [#allocation7], 2048
        $region52: #{tpu_custom_call.1} parent=39 // pred_fallthru
          _
        %s274 = sand.u32 %s43, 1
        %s275 = scalar_lea.sflag [#allocation4], %s274
        %s276 = sand.u32 %s43, 1
        %s277 = smul.addr %s276, 8
        %s278 = scalar_lea.vmem [#allocation3], %s277
        %p279 = pneg %p56
        %p280 = pneg %p53
        %p281 = pneg %p82
        %p282 = pneg %p79
        %p283 = pneg %p103
        %p284 = pneg %p100
        %p285 = pneg %p129
        %p286 = pneg %p126
        %p287 = pneg %p150
        %p288 = pneg %p147
        %p289 = pneg %p176
        %p290 = pneg %p173
        %s291 = sand.u32 %s163, 1
        %s292 = scalar_lea.sflag [#allocation5], %s291
        %s293 = sand.u32 %s163, 1
        %s294 = smul.addr %s293, 8
        %s295 = scalar_lea.vmem [#allocation9], %s294
        %s296 = smul.u32 16, %s28
        %p297 = scmp.eq.s32.totalorder %s28, 0
        // Predicated region
        $region53: #{tpu_custom_call.1} parent=39 // pred_check
          %p298 = pneg %p297
        $region54: #{tpu_custom_call.1} parent=39 // pred_check_branch
          %300 = sbr.rel (%p298) target = $region56
        $region55: #{tpu_custom_call.1} parent=39 // pred_region
          %v301 = vld [vmem:[%s4] sm:$0x1]
          %v303 = vlaneseq
          %v304 = vshrl.u32 %v303, 7
          %v305 = vsub.s32 0, %v304
          %v306 = vrot.slane %v301, %v305
          %308 = vst [vmem:[#allocation2] sm:$0xff] %v306
        $region56: #{tpu_custom_call.1} parent=39 // pred_fallthru
          _
        %v309 = vld [vmem:[%s261] sm:$0xff]
        %v310 = vld [vmem:[#allocation6] sm:$0xff]
        %v311 = vld [vmem:[#allocation6 + $0x8] sm:$0xff]
        %v312 = vld [vmem:[#allocation6 + $0x10] sm:$0xff]
        %v313 = vld [vmem:[#allocation6 + $0x18] sm:$0xff]
        %v314 = vld [vmem:[#allocation6 + $0x20] sm:$0xff]
        %v315 = vld [vmem:[#allocation6 + $0x28] sm:$0xff]
        %v316 = vld [vmem:[#allocation6 + $0x30] sm:$0xff]
        %v317 = vld [vmem:[#allocation6 + $0x38] sm:$0xff]
        %v318 = vld [vmem:[#allocation6 + $0x40] sm:$0xff]
        %v319 = vld [vmem:[#allocation6 + $0x48] sm:$0xff]
        %v320 = vld [vmem:[#allocation6 + $0x50] sm:$0xff]
        %v321 = vld [vmem:[#allocation6 + $0x58] sm:$0xff]
        %v322 = vld [vmem:[#allocation6 + $0x60] sm:$0xff]
        %v323 = vld [vmem:[#allocation6 + $0x68] sm:$0xff]
        %v324 = vld [vmem:[#allocation6 + $0x70] sm:$0xff]
        %v325 = vld [vmem:[#allocation6 + $0x78] sm:$0xff]
        %s326 = scalar_lea.vmem %s2, %s28
        %v327 = vld [vmem:[%s326] sm:$0x1]
        %v329 = vlaneseq
        %v330 = vshrl.u32 %v329, 7
        %v331 = vsub.s32 0, %v330
        %v332 = vrot.slane %v327, %v331
        %334 = vmatprep.subr.mxu0 0.0
        %335 = vmatpush1.msra.mxu0 %v310
        %336 = vmatprep.subr.mxu0 0.0
        %337 = vmatpush1.msra.mxu0 %v311
        %338 = vmatprep.subr.mxu0 0.0
        %339 = vmatpush1.msra.mxu0 %v312
        %340 = vmatprep.subr.mxu0 0.0
        %341 = vmatpush1.msra.mxu0 %v313
        %342 = vmatprep.subr.mxu0 0.0
        %343 = vmatpush1.msra.mxu0 %v314
        %344 = vmatprep.subr.mxu0 0.0
        %345 = vmatpush1.msra.mxu0 %v315
        %346 = vmatprep.subr.mxu0 0.0
        %347 = vmatpush1.msra.mxu0 %v316
        %348 = vmatprep.subr.mxu0 0.0
        %349 = vmatpush1.msra.mxu0 %v317
        %350 = vmatprep.subr.mxu0 0.0
        %351 = vmatpush1.msra.mxu0 %v318
        %352 = vmatprep.subr.mxu0 0.0
        %353 = vmatpush1.msra.mxu0 %v319
        %354 = vmatprep.subr.mxu0 0.0
        %355 = vmatpush1.msra.mxu0 %v320
        %356 = vmatprep.subr.mxu0 0.0
        %357 = vmatpush1.msra.mxu0 %v321
        %358 = vmatprep.subr.mxu0 0.0
        %359 = vmatpush1.msra.mxu0 %v322
        %360 = vmatprep.subr.mxu0 0.0
        %361 = vmatpush1.msra.mxu0 %v323
        %362 = vmatprep.subr.mxu0 0.0
        %363 = vmatpush1.msra.mxu0 %v324
        %364 = vmatprep.subr.mxu0 0.0
        %365 = vmatpush1.msra.mxu0 %v325
        %366 = vmatprep.subr.mxu0 0.0
        %367 = vmatpush1.msra.mxu0 0.0
        %368 = vmatprep.subr.mxu0 0.0
        %369 = vmatpush1.msra.mxu0 0.0
        %370 = vmatprep.subr.mxu0 0.0
        %371 = vmatpush1.msra.mxu0 0.0
        %372 = vmatprep.subr.mxu0 0.0
        %373 = vmatpush1.msra.mxu0 0.0
        %374 = vmatprep.subr.mxu0 0.0
        %375 = vmatpush1.msra.mxu0 0.0
        %376 = vmatprep.subr.mxu0 0.0
        %377 = vmatpush1.msra.mxu0 0.0
        %378 = vmatprep.subr.mxu0 0.0
        %379 = vmatpush1.msra.mxu0 0.0
        %380 = vmatprep.subr.mxu0 0.0
        %381 = vmatpush1.msra.mxu0 0.0
        %382 = vmatprep.subr.mxu0 0.0
        %383 = vmatpush1.msra.mxu0 0.0
        %384 = vmatprep.subr.mxu0 0.0
        %385 = vmatpush1.msra.mxu0 0.0
        %386 = vmatprep.subr.mxu0 0.0
        %387 = vmatpush1.msra.mxu0 0.0
        %388 = vmatprep.subr.mxu0 0.0
        %389 = vmatpush1.msra.mxu0 0.0
        %390 = vmatprep.subr.mxu0 0.0
        %391 = vmatpush1.msra.mxu0 0.0
        %392 = vmatprep.subr.mxu0 0.0
        %393 = vmatpush1.msra.mxu0 0.0
        %394 = vmatprep.subr.mxu0 0.0
        %395 = vmatpush1.msra.mxu0 0.0
        %396 = vmatprep.subr.mxu0 0.0
        %397 = vmatpush1.msra.mxu0 0.0
        %398 = vmatprep.mubr.f32.mxu0 0.0
        %399 = vmatmul.mubr.f32.gmra.mrb[0].mxu0 %v309
        %v400 = vpop.f32.mrb[0].mxu0
        %v401 = vadd.f32 %v332, %v400
        %v402 = vpop.f32.mrb[0].mxu0
        %403 = vdwg.mxu0
        %v404 = vmul.f32 %v401, 0.5
        %v405 = vmul.f32 %v401, 0.70710677
        %v406 = verf.f32.pop %v405
        %v407 = vadd.f32 %v406, 1.0
        %v408 = vmul.f32 %v404, %v407
        %v409 = vld [vmem:[#allocation2] sm:$0xff]
        %v410 = vld [vmem:[#allocation8] sm:$0xff]
        %v411 = vld [vmem:[#allocation8 + $0x8] sm:$0xff]
        %v412 = vld [vmem:[#allocation8 + $0x10] sm:$0xff]
        %v413 = vld [vmem:[#allocation8 + $0x18] sm:$0xff]
        %v414 = vld [vmem:[#allocation8 + $0x20] sm:$0xff]
        %v415 = vld [vmem:[#allocation8 + $0x28] sm:$0xff]
        %v416 = vld [vmem:[#allocation8 + $0x30] sm:$0xff]
        %v417 = vld [vmem:[#allocation8 + $0x38] sm:$0xff]
        %v418 = vld [vmem:[#allocation8 + $0x40] sm:$0xff]
        %v419 = vld [vmem:[#allocation8 + $0x48] sm:$0xff]
        %v420 = vld [vmem:[#allocation8 + $0x50] sm:$0xff]
        %v421 = vld [vmem:[#allocation8 + $0x58] sm:$0xff]
        %v422 = vld [vmem:[#allocation8 + $0x60] sm:$0xff]
        %v423 = vld [vmem:[#allocation8 + $0x68] sm:$0xff]
        %v424 = vld [vmem:[#allocation8 + $0x70] sm:$0xff]
        %v425 = vld [vmem:[#allocation8 + $0x78] sm:$0xff]
        %426 = vmatprep.subr.mxu0 0.0
        %427 = vmatpush1.msra.mxu0 %v410
        %428 = vmatprep.subr.mxu0 0.0
        %429 = vmatpush1.msra.mxu0 %v411
        %430 = vmatprep.subr.mxu0 0.0
        %431 = vmatpush1.msra.mxu0 %v412
        %432 = vmatprep.subr.mxu0 0.0
        %433 = vmatpush1.msra.mxu0 %v413
        %434 = vmatprep.subr.mxu0 0.0
        %435 = vmatpush1.msra.mxu0 %v414
        %436 = vmatprep.subr.mxu0 0.0
        %437 = vmatpush1.msra.mxu0 %v415
        %438 = vmatprep.subr.mxu0 0.0
        %439 = vmatpush1.msra.mxu0 %v416
        %440 = vmatprep.subr.mxu0 0.0
        %441 = vmatpush1.msra.mxu0 %v417
        %442 = vmatprep.subr.mxu0 0.0
        %443 = vmatpush1.msra.mxu0 %v418
        %444 = vmatprep.subr.mxu0 0.0
        %445 = vmatpush1.msra.mxu0 %v419
        %446 = vmatprep.subr.mxu0 0.0
        %447 = vmatpush1.msra.mxu0 %v420
        %448 = vmatprep.subr.mxu0 0.0
        %449 = vmatpush1.msra.mxu0 %v421
        %450 = vmatprep.subr.mxu0 0.0
        %451 = vmatpush1.msra.mxu0 %v422
        %452 = vmatprep.subr.mxu0 0.0
        %453 = vmatpush1.msra.mxu0 %v423
        %454 = vmatprep.subr.mxu0 0.0
        %455 = vmatpush1.msra.mxu0 %v424
        %456 = vmatprep.subr.mxu0 0.0
        %457 = vmatpush1.msra.mxu0 %v425
        %458 = vmatprep.subr.mxu0 0.0
        %459 = vmatpush1.msra.mxu0 0.0
        %460 = vmatprep.subr.mxu0 0.0
        %461 = vmatpush1.msra.mxu0 0.0
        %462 = vmatprep.subr.mxu0 0.0
        %463 = vmatpush1.msra.mxu0 0.0
        %464 = vmatprep.subr.mxu0 0.0
        %465 = vmatpush1.msra.mxu0 0.0
        %466 = vmatprep.subr.mxu0 0.0
        %467 = vmatpush1.msra.mxu0 0.0
        %468 = vmatprep.subr.mxu0 0.0
        %469 = vmatpush1.msra.mxu0 0.0
        %470 = vmatprep.subr.mxu0 0.0
        %471 = vmatpush1.msra.mxu0 0.0
        %472 = vmatprep.subr.mxu0 0.0
        %473 = vmatpush1.msra.mxu0 0.0
        %474 = vmatprep.subr.mxu0 0.0
        %475 = vmatpush1.msra.mxu0 0.0
        %476 = vmatprep.subr.mxu0 0.0
        %477 = vmatpush1.msra.mxu0 0.0
        %478 = vmatprep.subr.mxu0 0.0
        %479 = vmatpush1.msra.mxu0 0.0
        %480 = vmatprep.subr.mxu0 0.0
        %481 = vmatpush1.msra.mxu0 0.0
        %482 = vmatprep.subr.mxu0 0.0
        %483 = vmatpush1.msra.mxu0 0.0
        %484 = vmatprep.subr.mxu0 0.0
        %485 = vmatpush1.msra.mxu0 0.0
        %486 = vmatprep.subr.mxu0 0.0
        %487 = vmatpush1.msra.mxu0 0.0
        %488 = vmatprep.subr.mxu0 0.0
        %489 = vmatpush1.msra.mxu0 0.0
        %490 = vmatprep.mubr.f32.mxu0 0.0
        %491 = vmatmul.mubr.f32.gmra.mrb[0].mxu0 %v408
        %v492 = vpop.f32.mrb[0].mxu0
        %v493 = vadd.f32 0.0, %v492
        %v494 = vpop.f32.mrb[0].mxu0
        %495 = vdwg.mxu0
        %v496 = vadd.f32 %v409, %v493
        %497 = vst [vmem:[#allocation2] sm:$0xff] %v496
        // Predicated region
        $region57: #{tpu_custom_call.1} parent=39 // pred_check
          %p498 = pneg %p297
        $region58: #{tpu_custom_call.1} parent=39 // pred_check_branch
          %500 = sbr.rel (%p498) target = $region60
        $region59: #{tpu_custom_call.1} parent=39 // pred_region
          %v501 = vld [vmem:[#allocation2] sm:$0xff]
          %502 = vst [vmem:[%s295] sm:$0xff] %v501
        $region60: #{tpu_custom_call.1} parent=39 // pred_fallthru
          _
        %s503 = sand.u32 %s163, 1
        %s504 = scalar_lea.sflag [#allocation5], %s503
        %s505 = sand.u32 %s163, 1
        %s506 = smul.addr %s505, 8
        %s507 = scalar_lea.vmem [#allocation9], %s506
        // Predicated region
        $region61: #{tpu_custom_call.1} parent=39 // pred_check
          %p508 = pneg %p173
        $region62: #{tpu_custom_call.1} parent=39 // pred_check_branch
          %510 = sbr.rel (%p508) target = $region64
        $region63: #{tpu_custom_call.1} parent=39 // pred_region
          %s512 = ssub.s32 128, 128
          %513 = vsyncadd %s504, %s512
          %s514 = smul.addr %s27, 128
          %s515 = scalar_lea.hbm %s5, %s514
          %s517 = sshll.u32 %s507, 4
          %s518 = int_to_ptr.vmem [resolvable:$true] %s517
          %520 = dma.vmem_to_hbm [thread:$0]  %s518, 128, %s515, %s504
        $region64: #{tpu_custom_call.1} parent=39 // pred_fallthru
          _
      $region40: #{tpu_custom_call.1} parent=5 // pred_fallthru
        _
      %p521 = scmp.le.s32.totalorder 2, %s18
      // Predicated region
      $region65: #{tpu_custom_call.1} parent=5 // pred_check
        %p522 = pneg %p521
      $region66: #{tpu_custom_call.1} parent=5 // pred_check_branch
        %524 = sbr.rel (%p522) target = $region68
      $region67: #{tpu_custom_call.1} parent=5 // pred_region
        %s525 = ssub.s32 %s18, 2
        // Predicated region
        $region69: #{tpu_custom_call.1} parent=67 // pred_check
          %p526 = pneg %p179
        $region70: #{tpu_custom_call.1} parent=67 // pred_check_branch
          %528 = sbr.rel (%p526) target = $region72
        $region71: #{tpu_custom_call.1} parent=67 // pred_region
          %s529 = sand.u32 %s164, 1
          %s530 = scalar_lea.sflag [#allocation5], %s529
          %s531 = sand.u32 %s164, 1
          %s532 = smul.addr %s531, 8
          %s533 = scalar_lea.vmem [#allocation9], %s532
          %534 = dma.done %s530, 128
        $region72: #{tpu_custom_call.1} parent=67 // pred_fallthru
          _
      $region68: #{tpu_custom_call.1} parent=5 // pred_fallthru
        _
    $region6: #{tpu_custom_call.1} parent=1 // loop_footer
      %s22 = sadd.s32 1, %s18
    $region7: #{tpu_custom_call.1} parent=1 // loop_footer_branch
      %17 = sbr.rel target = $region3
    $region8: #{tpu_custom_call.1} parent=1 // loop_exit
      _
    %535 = vsyncpa [#allocation4], 1
    %s536 = scalar_lea.sflag [#allocation4], 1
    %537 = vsyncpa %s536, 1
    %538 = vsyncpa [#allocation7], 1
    %539 = vsyncpa [#allocation5], 1
    %s540 = scalar_lea.sflag [#allocation5], 1
    %541 = vsyncpa %s540, 1

</llo_original>
